<compile_context>
chip_gen: v7x
topology: tpu7x:2x2x1
jax: 0.10.0
libtpu: 0.0.40
codegen_flags: <defaults>
</compile_context>

<pallas_src>
import math
import functools

import jax
import jax.numpy as jnp
from jax.experimental import pallas as pl
from jax.experimental.pallas import tpu as pltpu


def _build_pe(d_model: int, max_len: int) -> jnp.ndarray:
    """Sinusoidal positional-encoding table, shape [1, max_len, d_model] (even d_model)."""
    assert d_model % 2 == 0, "PositionalEncoding requires even d_model (matches PyTorch)"
    position = jnp.arange(max_len, dtype=jnp.float32)[:, None]                  # [L, 1]
    div_term = jnp.exp(jnp.arange(0, d_model, 2, dtype=jnp.float32)
                       * (-math.log(10000.0) / d_model))                         # [D/2]
    sin = jnp.sin(position * div_term)                                           # [L, D/2]
    cos = jnp.cos(position * div_term)                                           # [L, D/2]
    # interleave: even indices = sin, odd indices = cos  (matches pe[0,:,0::2]/[1::2])
    pe = jnp.stack([sin, cos], axis=-1).reshape(max_len, d_model)                # [L, D]
    return pe[None, :, :]                                                        # [1, L, D]


def _pe_dropout_kernel(seed_ref, x_ref, pe_ref, o_ref, *,
                       p, apply_dropout, rows_per_batch, block_rows, lanes):
    # blocks: x_ref/o_ref [1, block_rows, lanes] (batch b), pe_ref [1, block_rows, lanes]
    val = x_ref[...] + pe_ref[...]

    if apply_dropout and p > 0.0:
        # Inverted dropout (training semantics of nn.Dropout).
        # TODO(synk): RNG stream differs from torch's nn.Dropout; only statistics match.
        r = pl.program_id(0)          # row-tile index
        b = pl.program_id(1)          # batch index
        base = (b * rows_per_batch + r * block_rows) * lanes            # scalar int32
        shape = val.shape                                               # (1, block_rows, lanes)
        row_i = jax.lax.broadcasted_iota(jnp.int32, shape, 1)
        lane_i = jax.lax.broadcasted_iota(jnp.int32, shape, 2)
        idx = (base + row_i * lanes + lane_i).astype(jnp.uint32)        # global element id
        seed_u = seed_ref[0].astype(jnp.uint32)
        # splitmix32-style avalanche hash of (seed, idx) -> uniform uint32
        h = idx ^ (seed_u * jnp.uint32(0x9E3779B9))
        h = (h ^ (h >> 16)) * jnp.uint32(0x7FEB352D)
        h = (h ^ (h >> 15)) * jnp.uint32(0x846CA68B)
        h = h ^ (h >> 16)
        threshold = jnp.uint32(min(int(round(p * 4294967296.0)), 4294967295))
        keep = h >= threshold                                           # drop with prob p
        scale = jnp.asarray(1.0 / (1.0 - p), dtype=val.dtype)
        val = jnp.where(keep, val * scale, jnp.zeros_like(val))

    o_ref[...] = val.astype(o_ref.dtype)


def _pick_row_tile(rows: int, target_rows: int) -> int:
    """Largest row-tile <= target that divides `rows` and is a multiple of 8 (else full)."""
    if rows <= target_rows:
        return rows
    t = (target_rows // 8) * 8
    while t >= 8:
        if rows % t == 0:
            return t
        t -= 8
    return rows


def positional_encoding_forward(x, pe_full, *, p=0.1, training=False, seed=0):
    """x: [B, S, D]; pe_full: [1, max_len, D]. Returns x + pe[:, :S] (+ dropout if training)."""
    B, S, D = x.shape
    assert pe_full.shape[0] == 1 and pe_full.shape[2] == D and pe_full.shape[1] >= S
    pe = pe_full[:, :S, :].astype(x.dtype)                              # [1, S, D] static slice

    F = S * D
    if F % 128 == 0:
        # Lane-dense layout: last dim exactly 128 lanes (elementwise op -> free reshape).
        lanes = 128
        rows = F // 128
        xr = x.reshape(B, rows, lanes)
        per = pe.reshape(1, rows, lanes)
    else:
        lanes = D
        rows = S
        xr = x
        per = pe

    itemsize = jnp.dtype(x.dtype).itemsize
    target_rows = max(8, (1 << 20) // (lanes * itemsize))               # ~1 MiB blocks
    tr = _pick_row_tile(rows, target_rows)
    grid = (rows // tr, B)   # row-tiles outer, batch inner -> pe block resident across batch

    seed_arr = jnp.asarray([seed], dtype=jnp.int32)

    kernel = functools.partial(
        _pe_dropout_kernel, p=float(p), apply_dropout=bool(training),
        rows_per_batch=rows, block_rows=tr, lanes=lanes)

    out = pl.pallas_call(
        kernel,
        out_shape=jax.ShapeDtypeStruct((B, rows, lanes), x.dtype),
        grid_spec=pltpu.PrefetchScalarGridSpec(
            num_scalar_prefetch=1,                                      # seed -> SMEM
            grid=grid,
            in_specs=[
                pl.BlockSpec((1, tr, lanes), lambda r, b, seed: (b, r, 0)),   # x
                pl.BlockSpec((1, tr, lanes), lambda r, b, seed: (0, r, 0)),   # pe (batch-bcast)
            ],
            out_specs=pl.BlockSpec((1, tr, lanes), lambda r, b, seed: (b, r, 0)),
        ),
        compiler_params=pltpu.CompilerParams(
            dimension_semantics=("parallel", "parallel"),               # stateless -> shardable
        ),
    )(seed_arr, xr, per)

    return out.reshape(B, S, D)


if __name__ == "__main__":
    d_model = 32
    max_len = 64
    dropout_p = 0.1
    B, S = 2, 8

    key = jax.random.PRNGKey(0)
    x = jax.random.normal(key, (B, S, d_model), dtype=jnp.float32)

    pe_full = _build_pe(d_model, max_len)

    # Eval mode (dropout disabled) — exact match to x + pe[:, :S]
    out_eval = positional_encoding_forward(x, pe_full, p=dropout_p, training=False)
    out_eval = jax.block_until_ready(out_eval)
    ref = x + pe_full[:, :S, :]
    assert out_eval.shape == (B, S, d_model)
    assert jnp.allclose(out_eval, ref, atol=1e-5, rtol=1e-5), "mismatch vs reference"

    # Training mode (dropout applied in-kernel, deterministic seed)
    out_train = positional_encoding_forward(x, pe_full, p=dropout_p, training=True, seed=123)
    out_train = jax.block_until_ready(out_train)
    assert out_train.shape == (B, S, d_model)
    # every surviving element equals ref / (1-p); dropped elements are 0
    scaled = ref / (1.0 - dropout_p)
    ok = jnp.logical_or(jnp.isclose(out_train, scaled, atol=1e-5),
                        jnp.isclose(out_train, 0.0, atol=1e-6))
    assert bool(jnp.all(ok)), "dropout output has unexpected values"
    # sanity: dropout actually drops something, but nowhere near everything (p=0.1)
    zeros = int(jnp.sum(jnp.isclose(out_train, 0.0, atol=1e-6)))
    assert 0 < zeros < out_train.size // 2, f"implausible dropout zero count: {zeros}"

    print("KERNEL_OK")
</pallas_src>

<mosaic_0001>
module attributes {stable_mosaic.version = 11 : i64} {
  func.func @_pe_dropout_kernel(%arg0: i32, %arg1: i32, %arg2: memref<1xi32, #tpu.memory_space<smem>>, %arg3: memref<1x2x128xf32, #tpu.memory_space<vmem>>, %arg4: memref<1x2x128xf32, #tpu.memory_space<vmem>>, %arg5: memref<1x2x128xf32, #tpu.memory_space<vmem>>) attributes {dimension_semantics = [#tpu.dimension_semantics<parallel>, #tpu.dimension_semantics<parallel>], iteration_bounds = array<i64: 1, 2>, scalar_prefetch = 1 : i64, scratch_operands = 0 : i64, tpu.core_type = #tpu.core_type<tc>, window_params = [{transform_indices = @transform_0, window_bounds = array<i64: 1, 2, 128>}, {transform_indices = @transform_1, window_bounds = array<i64: 1, 2, 128>}, {transform_indices = @transform_2, window_bounds = array<i64: 1, 2, 128>}]} {
    %c0 = arith.constant 0 : index
    %c0_0 = arith.constant 0 : index
    %c0_1 = arith.constant 0 : index
    %0 = vector.load %arg3[%c0, %c0_0, %c0_1] : memref<1x2x128xf32, #tpu.memory_space<vmem>>, vector<1x2x128xf32>
    %c0_2 = arith.constant 0 : index
    %c0_3 = arith.constant 0 : index
    %c0_4 = arith.constant 0 : index
    %1 = vector.load %arg4[%c0_2, %c0_3, %c0_4] : memref<1x2x128xf32, #tpu.memory_space<vmem>>, vector<1x2x128xf32>
    %2 = arith.addf %0, %1 : vector<1x2x128xf32>
    %c0_5 = arith.constant 0 : index
    %c0_6 = arith.constant 0 : index
    %c0_7 = arith.constant 0 : index
    %3 = vector.load %arg5[%c0_5, %c0_6, %c0_7] : memref<1x2x128xf32, #tpu.memory_space<vmem>>, vector<1x2x128xf32>
    tpu.vector_store %arg5[%c0_5, %c0_6, %c0_7], %2 {strides = array<i32>} : memref<1x2x128xf32, #tpu.memory_space<vmem>>, vector<1x2x128xf32>,
    return
  }
  func.func @transform_0(%arg0: i32, %arg1: i32, %arg2: memref<1xi32, #tpu.memory_space<smem>>) -> (i32, i32, i32) {
    %c0_i32 = arith.constant 0 : i32
    %c0_i32_0 = arith.constant 0 : i32
    return %arg1, %arg0, %c0_i32 : i32, i32, i32
  }
  func.func @transform_1(%arg0: i32, %arg1: i32, %arg2: memref<1xi32, #tpu.memory_space<smem>>) -> (i32, i32, i32) {
    %c0_i32 = arith.constant 0 : i32
    %c0_i32_0 = arith.constant 0 : i32
    %c0_i32_1 = arith.constant 0 : i32
    return %c0_i32, %arg0, %c0_i32_0 : i32, i32, i32
  }
  func.func @transform_2(%arg0: i32, %arg1: i32, %arg2: memref<1xi32, #tpu.memory_space<smem>>) -> (i32, i32, i32) {
    %c0_i32 = arith.constant 0 : i32
    %c0_i32_0 = arith.constant 0 : i32
    return %arg1, %arg0, %c0_i32 : i32, i32, i32
  }
}

</mosaic_0001>

<llo_original>
// kernel: tpu_custom_call.1
$region0: #{tpu_custom_call.1}
  #allocation0 [shape = 'u32[]', space=smem, size = 0x4, offset = 0x4, fixed_abs, tag = 'smem constant byte address 0x4 - core index']
  #allocation1 [shape = 'u32[144,128]{1,0:T(1,128)}', space=vmem, size = 0x12000, scoped, tag = 'internal scratch']
  #allocation2 [shape = 's32[1]{0}', space=sflag, size = 0x4, scoped, tag = 'scoped memory for tpu_custom_call.1']
  #allocation3 [shape = 's32[1]{0:T(128)S(6)}', space=smem, size = 0x200, scoped, tag = 'prefetched SMEM operand 0']
  %s0 = inlined_call_operand.<no memory space> [shape: s32[1], index: 0, kind: input, shape index: {}]
  %s1 = inlined_call_operand.hbm [shape: f32[2,2,128], index: 1, kind: input, shape index: {}]
  %s2 = inlined_call_operand.vmem [shape: f32[1,2,128], index: 2, kind: input, shape index: {}]
  %s3 = inlined_call_operand.hbm [shape: f32[2,2,128], index: 3, kind: output, shape index: {}]
  %s4 = sld [smem:[#allocation0]]
  $region45: #{tpu_custom_call.1} parent=0
    _
  %s6 = ssub.s32 1, %s4
  %s7 = scalar_select 0, %s6, %s4
  %8 = sst [smem:[#allocation3]] %s0
  $region1: #{tpu_custom_call.1} parent=0
    #allocation4 [shape = 'u8[2048]{0}', space=vmem, size = 0x800, scoped, tag = 'input window, operand 1']
    #allocation5 [shape = 's32[2]{0}', space=sflag, size = 0x8, scoped, tag = 'scoped memory for tpu_custom_call.1']
    #allocation6 [shape = 's32[2]{0}', space=sflag, size = 0x8, scoped, tag = 'scoped memory for tpu_custom_call.1']
    #allocation7 [shape = 'u8[2048]{0}', space=vmem, size = 0x800, scoped, tag = 'output window, operand 0']
    %9 = vsyncpa [#allocation5], 0
    %s10 = scalar_lea.sflag [#allocation5], 1
    %11 = vsyncpa %s10, 0
    %12 = vsyncpa [#allocation6], 0
    %s13 = scalar_lea.sflag [#allocation6], 1
    %14 = vsyncpa %s13, 0
    loop: start=0, step=1, limit=4
    $region2: #{tpu_custom_call.1} parent=1 // loop_pre_header
      _
    $region3: #{tpu_custom_call.1} parent=1 // loop_header
      %s16 = sphi 0, %s20
      %p17 = scmp.ge.s32.totalorder %s16, 4
      %s23 = sphi 0, %s35
      %s24 = sphi 0, %s31
      %s25 = sphi 0, %s23
      %s26 = sphi 0, %s24
      %s27 = sphi 0, %s25
      %s28 = sphi 0, %s26
      %s40 = sphi 0, %s42
      %s43 = sphi 0, %s40
      %s44 = sphi 0, %s43
      %s60 = sphi 0, %s44
      %s66 = sphi 0, %s68
      %s69 = sphi 0, %s66
      %s70 = sphi 0, %s69
      %s86 = sphi 0, %s70
      %s94 = sphi 0, %s96
      %s97 = sphi 0, %s94
      %s98 = sphi 0, %s97
      %s114 = sphi 0, %s98
    $region4: #{tpu_custom_call.1} parent=1 // loop_header_branch
      %19 = sbr.rel (%p17) target = $region8
    $region5: #{tpu_custom_call.1} parent=1 // loop_body
      %s21 = ssub.s32 %s16, 1
      %s22 = ssub.s32 %s16, 2
      %s29 = sadd.s32 1, %s24
      %p30 = scmp.ge.s32.totalorder %s29, 2
      %s31 = scalar_select %p30, 0, %s29
      %s32 = sadd.s32 1, %s23
      %s33 = scalar_select %p30, %s32, %s23
      %p34 = scmp.ge.s32.totalorder %s33, 1
      %s35 = scalar_select %p34, 0, %s33
      %s36 = ssub.s32 %s24, %s31
      %s37 = ssub.s32 %s23, %s35
      %s38 = sor.u32 %s36, %s37
      %p39 = scmp.eq.s32.totalorder %s38, 0
      %s41 = sadd.s32 %s40, 1
      %s42 = scalar_select %p39, %s40, %s41
      %p45 = pneg %p39
      %p46 = scmp.eq.s32.totalorder %s16, 1
      %p47 = por %p45, %p46
      %p48 = scmp.ne.s32.totalorder %s40, %s43
      %p49 = scmp.eq.s32.totalorder %s16, 0
      %p50 = por %p48, %p49
      %p51 = scmp.ne.s32.totalorder %s40, %s43
      %p52 = scmp.eq.s32.totalorder %s21, 1
      %p53 = por %p51, %p52
      %p54 = scmp.ne.s32.totalorder %s43, %s44
      %p55 = scmp.eq.s32.totalorder %s21, 0
      %p56 = por %p54, %p55
      %p57 = scmp.ne.s32.totalorder %s43, %s44
      %p58 = scmp.eq.s32.totalorder %s22, 1
      %p59 = por %p57, %p58
      %p61 = scmp.ne.s32.totalorder %s44, %s60
      %p62 = scmp.eq.s32.totalorder %s22, 0
      %p63 = por %p61, %p62
      %s64 = ssub.s32 %s23, %s35
      %p65 = scmp.eq.s32.totalorder %s64, 0
      %s67 = sadd.s32 %s66, 1
      %s68 = scalar_select %p65, %s66, %s67
      %p71 = pneg %p65
      %p72 = scmp.eq.s32.totalorder %s16, 1
      %p73 = por %p71, %p72
      %p74 = scmp.ne.s32.totalorder %s66, %s69
      %p75 = scmp.eq.s32.totalorder %s16, 0
      %p76 = por %p74, %p75
      %p77 = scmp.ne.s32.totalorder %s66, %s69
      %p78 = scmp.eq.s32.totalorder %s21, 1
      %p79 = por %p77, %p78
      %p80 = scmp.ne.s32.totalorder %s69, %s70
      %p81 = scmp.eq.s32.totalorder %s21, 0
      %p82 = por %p80, %p81
      %p83 = scmp.ne.s32.totalorder %s69, %s70
      %p84 = scmp.eq.s32.totalorder %s22, 1
      %p85 = por %p83, %p84
      %p87 = scmp.ne.s32.totalorder %s70, %s86
      %p88 = scmp.eq.s32.totalorder %s22, 0
      %p89 = por %p87, %p88
      %s90 = ssub.s32 %s24, %s31
      %s91 = ssub.s32 %s23, %s35
      %s92 = sor.u32 %s90, %s91
      %p93 = scmp.eq.s32.totalorder %s92, 0
      %s95 = sadd.s32 %s94, 1
      %s96 = scalar_select %p93, %s94, %s95
      %p99 = pneg %p93
      %p100 = scmp.eq.s32.totalorder %s16, 1
      %p101 = por %p99, %p100
      %p102 = scmp.ne.s32.totalorder %s94, %s97
      %p103 = scmp.eq.s32.totalorder %s16, 0
      %p104 = por %p102, %p103
      %p105 = scmp.ne.s32.totalorder %s94, %s97
      %p106 = scmp.eq.s32.totalorder %s21, 1
      %p107 = por %p105, %p106
      %p108 = scmp.ne.s32.totalorder %s97, %s98
      %p109 = scmp.eq.s32.totalorder %s21, 0
      %p110 = por %p108, %p109
      %p111 = scmp.ne.s32.totalorder %s97, %s98
      %p112 = scmp.eq.s32.totalorder %s22, 1
      %p113 = por %p111, %p112
      %p115 = scmp.ne.s32.totalorder %s98, %s114
      %p116 = scmp.eq.s32.totalorder %s22, 0
      %p117 = por %p115, %p116
      %p118 = scmp.le.s32.totalorder 1, %s16
      %p119 = scmp.lt.s32.totalorder %s16, 3
      %p120 = pnand %p118, %p119
      %p121 = pneg %p120
      // Predicated region
      $region9: #{tpu_custom_call.1} parent=5 // pred_check
        _
      $region10: #{tpu_custom_call.1} parent=5 // pred_check_branch
        %123 = sbr.rel (%p120) target = $region12
      $region11: #{tpu_custom_call.1} parent=5 // pred_region
        %s124 = ssub.s32 %s16, 1
        // Predicated region
        $region13: #{tpu_custom_call.1} parent=11 // pred_check
          %p125 = pneg %p82
        $region14: #{tpu_custom_call.1} parent=11 // pred_check_branch
          %127 = sbr.rel (%p125) target = $region16
        $region15: #{tpu_custom_call.1} parent=11 // pred_region
          %p128 = scmp.lt.s32.totalorder %s25, 0
          %s129 = scalar_select %p128, %s25, 0
          %s130 = smul.addr %s129, 2
          %s131 = scalar_lea.vmem %s2, %s130
        $region16: #{tpu_custom_call.1} parent=11 // pred_fallthru
          _
      $region12: #{tpu_custom_call.1} parent=5 // pred_fallthru
        _
      %p132 = scmp.lt.s32.totalorder %s16, 2
      // Predicated region
      $region17: #{tpu_custom_call.1} parent=5 // pred_check
        %p133 = pneg %p132
      $region18: #{tpu_custom_call.1} parent=5 // pred_check_branch
        %135 = sbr.rel (%p133) target = $region20
      $region19: #{tpu_custom_call.1} parent=5 // pred_region
        // Predicated region
        $region21: #{tpu_custom_call.1} parent=19 // pred_check
          %p136 = pneg %p50
        $region22: #{tpu_custom_call.1} parent=19 // pred_check_branch
          %138 = sbr.rel (%p136) target = $region24
        $region23: #{tpu_custom_call.1} parent=19 // pred_region
          %s139 = sand.u32 %s40, 1
          %s140 = scalar_lea.sflag [#allocation5], %s139
          %s141 = sand.u32 %s40, 1
          %s142 = smul.addr %s141, 2
          %s143 = scalar_lea.vmem [#allocation4], %s142
          %s145 = ssub.s32 32, 32
          %146 = vsyncadd %s140, %s145
          %s147 = sadd.s32 %s23, %s24
          %s148 = smul.addr %s147, 32
          %s149 = scalar_lea.hbm %s1, %s148
          %s151 = sshll.u32 %s143, 4
          %s152 = int_to_ptr.vmem [resolvable:$true] %s151
          %154 = dma.hbm_to_vmem [thread:$0]  %s149, 32, %s152, %s140
        $region24: #{tpu_custom_call.1} parent=19 // pred_fallthru
          _
      $region20: #{tpu_custom_call.1} parent=5 // pred_fallthru
        _
      %p155 = scmp.le.s32.totalorder 1, %s16
      %p156 = scmp.lt.s32.totalorder %s16, 3
      %p157 = pnand %p155, %p156
      %p158 = pneg %p157
      // Predicated region
      $region25: #{tpu_custom_call.1} parent=5 // pred_check
        _
      $region26: #{tpu_custom_call.1} parent=5 // pred_check_branch
        %160 = sbr.rel (%p157) target = $region28
      $region27: #{tpu_custom_call.1} parent=5 // pred_region
        %s161 = ssub.s32 %s16, 1
        %s162 = sand.u32 %s43, 1
        %s163 = scalar_lea.sflag [#allocation5], %s162
        %s164 = sand.u32 %s43, 1
        %s165 = smul.addr %s164, 2
        %s166 = scalar_lea.vmem [#allocation4], %s165
        // Predicated region
        $region29: #{tpu_custom_call.1} parent=27 // pred_check
          %p167 = pneg %p56
        $region30: #{tpu_custom_call.1} parent=27 // pred_check_branch
          %169 = sbr.rel (%p167) target = $region32
        $region31: #{tpu_custom_call.1} parent=27 // pred_region
          %170 = dma.done %s163, 32
        $region32: #{tpu_custom_call.1} parent=27 // pred_fallthru
          _
        %s171 = sand.u32 %s43, 1
        %s172 = scalar_lea.sflag [#allocation5], %s171
        %s173 = sand.u32 %s43, 1
        %s174 = smul.addr %s173, 2
        %s175 = scalar_lea.vmem [#allocation4], %s174
        %p176 = pneg %p56
        %p177 = pneg %p53
        %p178 = scmp.lt.s32.totalorder %s25, 0
        %s179 = scalar_select %p178, %s25, 0
        %s180 = smul.addr %s179, 2
        %s181 = scalar_lea.vmem %s2, %s180
        %p182 = pneg %p82
        %p183 = pneg %p79
        %p184 = pneg %p110
        %p185 = pneg %p107
        %s186 = sand.u32 %s97, 1
        %s187 = scalar_lea.sflag [#allocation6], %s186
        %s188 = sand.u32 %s97, 1
        %s189 = smul.addr %s188, 2
        %s190 = scalar_lea.vmem [#allocation7], %s189
        %p191 = scmp.lt.s32.totalorder %s25, 0
        %s192 = scalar_select %p191, %s25, 0
        %s193 = smul.addr %s192, 2
        %s194 = scalar_lea.vmem %s2, %s193
        %v195 = vld [vmem:[%s166] sm:$0x3]
        %v196 = vld [vmem:[%s194] sm:$0x3]
        %v197 = vadd.f32 %v195, %v196
        %198 = vst [vmem:[%s190] sm:$0x3] %v197
        %s199 = sand.u32 %s97, 1
        %s200 = scalar_lea.sflag [#allocation6], %s199
        %s201 = sand.u32 %s97, 1
        %s202 = smul.addr %s201, 2
        %s203 = scalar_lea.vmem [#allocation7], %s202
        // Predicated region
        $region33: #{tpu_custom_call.1} parent=27 // pred_check
          %p204 = pneg %p107
        $region34: #{tpu_custom_call.1} parent=27 // pred_check_branch
          %206 = sbr.rel (%p204) target = $region36
        $region35: #{tpu_custom_call.1} parent=27 // pred_region
          %s208 = ssub.s32 32, 32
          %209 = vsyncadd %s200, %s208
          %s210 = sadd.s32 %s25, %s26
          %s211 = smul.addr %s210, 32
          %s212 = scalar_lea.hbm %s3, %s211
          %s214 = sshll.u32 %s203, 4
          %s215 = int_to_ptr.vmem [resolvable:$true] %s214
          %217 = dma.vmem_to_hbm [thread:$0]  %s215, 32, %s212, %s200
        $region36: #{tpu_custom_call.1} parent=27 // pred_fallthru
          _
      $region28: #{tpu_custom_call.1} parent=5 // pred_fallthru
        _
      %p218 = scmp.le.s32.totalorder 2, %s16
      // Predicated region
      $region37: #{tpu_custom_call.1} parent=5 // pred_check
        %p219 = pneg %p218
      $region38: #{tpu_custom_call.1} parent=5 // pred_check_branch
        %221 = sbr.rel (%p219) target = $region40
      $region39: #{tpu_custom_call.1} parent=5 // pred_region
        %s222 = ssub.s32 %s16, 2
        // Predicated region
        $region41: #{tpu_custom_call.1} parent=39 // pred_check
          %p223 = pneg %p113
        $region42: #{tpu_custom_call.1} parent=39 // pred_check_branch
          %225 = sbr.rel (%p223) target = $region44
        $region43: #{tpu_custom_call.1} parent=39 // pred_region
          %s226 = sand.u32 %s98, 1
          %s227 = scalar_lea.sflag [#allocation6], %s226
          %s228 = sand.u32 %s98, 1
          %s229 = smul.addr %s228, 2
          %s230 = scalar_lea.vmem [#allocation7], %s229
          %231 = dma.done %s227, 32
        $region44: #{tpu_custom_call.1} parent=39 // pred_fallthru
          _
      $region40: #{tpu_custom_call.1} parent=5 // pred_fallthru
        _
    $region6: #{tpu_custom_call.1} parent=1 // loop_footer
      %s20 = sadd.s32 1, %s16
    $region7: #{tpu_custom_call.1} parent=1 // loop_footer_branch
      %15 = sbr.rel target = $region3
    $region8: #{tpu_custom_call.1} parent=1 // loop_exit
      _
    %232 = vsyncpa [#allocation5], 1
    %s233 = scalar_lea.sflag [#allocation5], 1
    %234 = vsyncpa %s233, 1
    %235 = vsyncpa [#allocation6], 1
    %s236 = scalar_lea.sflag [#allocation6], 1
    %237 = vsyncpa %s236, 1

</llo_original>
